<compile_context>
chip_gen: v6e
topology: v6e:2x2x1
jax: 0.10.0
libtpu: 0.0.40
codegen_flags: <defaults>
</compile_context>

<pallas_src>
import numpy as np
import jax
import jax.numpy as jnp
from jax import lax
from jax.experimental import pallas as pl
from jax.experimental.pallas import tpu as pltpu


def make_basic_block_kernel(NB, H, KP):
    NBH = NB * H

    def conv_bn(x_f32, w_ref, bias_row, first_row, last_row):
        """3x3 / stride-1 / pad-1 conv (3 banded matmuls, one per kernel row dy) with a
        folded-BN per-output-channel bias.  x_f32: (NBH, KP) f32 -> f32 (NBH, KP)."""
        # Row-shifted bf16 MXU operands.  pltpu.roll wraps rows across image boundaries;
        # the iota masks zero exactly those wrapped rows (== vertical pad=1).
        x_md = x_f32.astype(jnp.bfloat16)
        x_dn = jnp.where(first_row, 0.0,
                         pltpu.roll(x_f32, shift=1, axis=0)).astype(jnp.bfloat16)
        x_up = jnp.where(last_row, 0.0,
                         pltpu.roll(x_f32, shift=NBH - 1, axis=0)).astype(jnp.bfloat16)
        # Accumulate the three dy taps directly into one f32 accumulator:
        #   out[r] = x[r-1] @ Wb0 + x[r] @ Wb1 + x[r+1] @ Wb2
        acc = jnp.dot(x_dn, w_ref[0], preferred_element_type=jnp.float32)
        acc += jnp.dot(x_md, w_ref[1], preferred_element_type=jnp.float32)
        acc += jnp.dot(x_up, w_ref[2], preferred_element_type=jnp.float32)
        return acc + bias_row

    def kernel(x_ref, wb1_ref, wb2_ref, bias_ref, o_ref):
        # Per-image first/last row masks (row blocks are aligned to image boundaries).
        rows = lax.broadcasted_iota(jnp.int32, (NBH, KP), 0)
        first_row = (rows % H) == 0
        last_row = (rows % H) == H - 1

        x_f32 = x_ref[...].astype(jnp.float32)       # bf16 from HBM; f32 for shifts + identity

        # ---- conv1 (BN1 scale folded into wb1) -> bias -> ReLU ----
        h1 = jnp.maximum(conv_bn(x_f32, wb1_ref, bias_ref[0:1, :], first_row, last_row), 0.0)
        # ---- conv2 (BN2 scale folded into wb2) -> bias -> +identity -> ReLU ----
        out = conv_bn(h1, wb2_ref, bias_ref[1:2, :], first_row, last_row)
        o_ref[...] = jnp.maximum(out + x_f32, 0.0).astype(o_ref.dtype)

    return kernel


def banded_conv_weight(w_oihw, out_scale, W):
    """Banded matmul weights Wb[dy] (shape (W*Ci, W*Co)) for a 3x3 / stride-1 / pad-1
    conv: out_row[r] = sum_dy in_row[r+dy-1] @ Wb[dy].  Horizontal padding is baked in
    (out-of-range dx columns dropped) and a per-output-channel scale (folded BatchNorm)
    is multiplied in.  Returned in bf16 (MXU operand dtype)."""
    w = np.asarray(w_oihw, np.float32) * np.asarray(out_scale, np.float32)[:, None, None, None]
    Co, Ci, KH, KW = w.shape
    wb = np.zeros((KH, W * Ci, W * Co), np.float32)
    for dy in range(KH):
        for dx in range(KW):
            blk = w[:, :, dy, dx].T                        # (Ci, Co)
            for wo in range(W):
                wi = wo + dx - 1                           # input column feeding output col wo
                if 0 <= wi < W:
                    wb[dy, wi * Ci:(wi + 1) * Ci, wo * Co:(wo + 1) * Co] = blk
    return jnp.asarray(wb, jnp.bfloat16)


def pad_channels_w(w, CP):
    """Zero-pad a (Co, Ci, 3, 3) conv weight to (CP, CP, 3, 3)."""
    w = np.asarray(w, np.float32)
    Co, Ci, KH, KW = w.shape
    wp = np.zeros((CP, CP, KH, KW), np.float32)
    wp[:Co, :Ci] = w
    return wp


def fold_bn(gamma, beta, mean, var, eps):
    g = np.asarray(gamma, np.float32)
    b = np.asarray(beta, np.float32)
    m = np.asarray(mean, np.float32)
    v = np.asarray(var, np.float32)
    scale = g / np.sqrt(v + eps)
    bias = b - m * scale
    return scale, bias


def basic_block_forward(x_nchw, params, eps=1e-5, images_per_block=None):
    N, C, H, W = x_nchw.shape
    Cout = params["w1"].shape[0]
    assert Cout == C and params["w2"].shape[0] == Cout, \
        "stride=1 / downsample=None BasicBlock requires in_channels == out_channels"

    # Lane-dense layout: pad channels so the flattened (W*CP) width is a multiple of 128.
    # Padded channels are all-zero end to end (zero weights, zero bias, zero identity).
    CP = C
    while (W * CP) % 128 != 0:
        CP += 1
    KP = W * CP

    # Batch tiling: fold NB images into the matmul M dimension.  Keep grid length >= 2
    # (v7x two-TC sharding + pipeline overlap), then maximize M = NB*H under a VMEM cap.
    if images_per_block is None:
        best = 1
        for d in range(1, N + 1):
            if N % d == 0 and d * H * KP * 4 <= 8 * 1024 * 1024 and (N // d >= 2 or N == 1):
                best = d
        images_per_block = best
    NB = images_per_block
    assert N % NB == 0
    NBH = NB * H

    # NCHW -> NHWC -> zero-pad channels -> (N*H, W*CP); bf16 in HBM (halves input DMA).
    x_nhwc = jnp.transpose(x_nchw, (0, 2, 3, 1)).astype(jnp.float32)
    if CP != C:
        x_nhwc = jnp.pad(x_nhwc, ((0, 0), (0, 0), (0, 0), (0, CP - C)))
    x_flat = x_nhwc.reshape(N * H, KP).astype(jnp.bfloat16)

    # Fold eval-mode BN scales into the conv weights; keep only the per-channel biases.
    s1, b1 = fold_bn(params["gamma1"], params["beta1"], params["mean1"], params["var1"], eps)
    s2, b2 = fold_bn(params["gamma2"], params["beta2"], params["mean2"], params["var2"], eps)
    pad1 = np.ones(CP - C, np.float32)
    pad0 = np.zeros(CP - C, np.float32)
    s1p, b1p = np.concatenate([s1, pad1]), np.concatenate([b1, pad0])
    s2p, b2p = np.concatenate([s2, pad1]), np.concatenate([b2, pad0])
    wb1 = banded_conv_weight(pad_channels_w(params["w1"], CP), s1p, W)    # (3, KP, KP) bf16
    wb2 = banded_conv_weight(pad_channels_w(params["w2"], CP), s2p, W)    # (3, KP, KP) bf16
    # Biases tiled across W so they broadcast along the flattened (W*CP) lane axis.
    bias = jnp.asarray(np.stack([np.tile(b1p, W), np.tile(b2p, W)]), jnp.float32)  # (2, KP)

    kernel = make_basic_block_kernel(NB, H, KP)

    flops = 2 * 2 * 3 * (N * H) * KP * KP                       # 2 convs x 3 banded matmuls
    bytes_accessed = (N * H * KP * 2          # bf16 input
                      + N * H * KP * 4        # f32 output
                      + 2 * 3 * KP * KP * 2   # banded weights (bf16)
                      + 2 * KP * 4)           # folded BN biases

    def weight_spec(shape):
        # Constant index_map -> single-buffer (no pointless double-buffering of weights).
        return pl.BlockSpec(shape, lambda b: (0,) * len(shape),
                            pipeline_mode=pl.Buffered(1))

    out_flat = pl.pallas_call(
        kernel,
        out_shape=jax.ShapeDtypeStruct((N * H, KP), jnp.float32),
        grid=(N // NB,),
        in_specs=[
            pl.BlockSpec((NBH, KP), lambda b: (b, 0)),        # bf16 input (also the identity)
            weight_spec((3, KP, KP)),                         # banded conv1 + BN1 weights
            weight_spec((3, KP, KP)),                         # banded conv2 + BN2 weights
            pl.BlockSpec((2, KP), lambda b: (0, 0)),          # folded BN biases (f32)
        ],
        out_specs=pl.BlockSpec((NBH, KP), lambda b: (b, 0)),
        compiler_params=pltpu.CompilerParams(
            dimension_semantics=("parallel",),
            vmem_limit_bytes=48 * 1024 * 1024,
        ),
        cost_estimate=pl.CostEstimate(flops=flops, transcendentals=0,
                                      bytes_accessed=bytes_accessed),
    )(x_flat, wb1, wb2, bias)

    out = out_flat.reshape(N, H, W, CP)[..., :C]               # drop padded channels
    return jnp.transpose(out, (0, 3, 1, 2))                    # back to NCHW


def reference_forward(x, params, eps=1e-5):
    """Pure-JAX f32 reference (same semantics: eval-mode BN, stride=1, no downsample)."""
    def bn(y, g, b, m, v):
        g = jnp.asarray(g, jnp.float32); b = jnp.asarray(b, jnp.float32)
        m = jnp.asarray(m, jnp.float32); v = jnp.asarray(v, jnp.float32)
        s = g / jnp.sqrt(v + eps)
        return y * s[None, :, None, None] + (b - m * s)[None, :, None, None]

    dn = ("NCHW", "OIHW", "NCHW")
    y = lax.conv_general_dilated(x, params["w1"], (1, 1), ((1, 1), (1, 1)),
                                 dimension_numbers=dn)
    y = jax.nn.relu(bn(y, params["gamma1"], params["beta1"], params["mean1"], params["var1"]))
    y = lax.conv_general_dilated(y, params["w2"], (1, 1), ((1, 1), (1, 1)),
                                 dimension_numbers=dn)
    y = bn(y, params["gamma2"], params["beta2"], params["mean2"], params["var2"])
    return jax.nn.relu(y + x)


if __name__ == "__main__":
    N, C, H, W = 2, 4, 16, 16
    Cout = C  # stride=1, downsample=None

    key = jax.random.PRNGKey(0)
    k_x, k_w1, k_w2 = jax.random.split(key, 3)

    x = jax.random.normal(k_x, (N, C, H, W), dtype=jnp.float32)

    params = {
        "w1": 0.1 * jax.random.normal(k_w1, (Cout, C, 3, 3), dtype=jnp.float32),
        "w2": 0.1 * jax.random.normal(k_w2, (Cout, Cout, 3, 3), dtype=jnp.float32),
        "gamma1": 1.0 + 0.1 * np.arange(Cout, dtype=np.float32),
        "beta1": 0.05 * np.arange(Cout, dtype=np.float32),
        "mean1": 0.02 * np.arange(Cout, dtype=np.float32),
        "var1": 1.0 + 0.03 * np.arange(Cout, dtype=np.float32),
        "gamma2": 0.9 + 0.05 * np.arange(Cout, dtype=np.float32),
        "beta2": -0.02 * np.arange(Cout, dtype=np.float32),
        "mean2": -0.01 * np.arange(Cout, dtype=np.float32),
        "var2": 1.0 + 0.04 * np.arange(Cout, dtype=np.float32),
    }

    out = jax.block_until_ready(basic_block_forward(x, params))
    ref = jax.block_until_ready(reference_forward(x, params))

    # Tolerance reflects bf16 MXU operands + bf16 input vs the f32 reference;
    # observed error is O(1e-3..1e-2), inside 2e-2.
    np.testing.assert_allclose(np.asarray(out), np.asarray(ref), rtol=2e-2, atol=2e-2)
    assert out.shape == (N, C, H, W)
    print("KERNEL_OK")
</pallas_src>

<mosaic_0001>
module attributes {stable_mosaic.version = 11 : i64} {
  func.func @kernel(%arg0: i32, %arg1: memref<16x128xbf16, #tpu.memory_space<vmem>>, %arg2: memref<3x128x128xbf16, #tpu.memory_space<vmem>>, %arg3: memref<3x128x128xbf16, #tpu.memory_space<vmem>>, %arg4: memref<2x128xf32, #tpu.memory_space<vmem>>, %arg5: memref<16x128xf32, #tpu.memory_space<vmem>>) attributes {dimension_semantics = [#tpu.dimension_semantics<parallel>], iteration_bounds = array<i64: 2>, scalar_prefetch = 0 : i64, scratch_operands = 0 : i64, tpu.core_type = #tpu.core_type<tc>, window_params = [{transform_indices = @transform_0, window_bounds = array<i64: 16, 128>}, {pipeline_mode = #tpu.pipeline_mode<synchronous>, transform_indices = @transform_1, window_bounds = array<i64: 3, 128, 128>}, {pipeline_mode = #tpu.pipeline_mode<synchronous>, transform_indices = @transform_2, window_bounds = array<i64: 3, 128, 128>}, {pipeline_mode = #tpu.pipeline_mode<synchronous>, transform_indices = @transform_3, window_bounds = array<i64: 2, 128>}, {transform_indices = @transform_4, window_bounds = array<i64: 16, 128>}]} {
    %0 = tpu.iota {dimensions = array<i32: 0>} : vector<16x128xi32>
    %c16_i32 = arith.constant 16 : i32
    %c0_i32 = arith.constant 0 : i32
    %1 = arith.cmpi eq, %c16_i32, %c0_i32 : i32
    %c1_i32 = arith.constant 1 : i32
    %2 = arith.select %1, %c1_i32, %c16_i32 : i32
    %3 = vector.broadcast %2 : i32 to vector<16x128xi32>
    %4 = arith.remsi %0, %3 : vector<16x128xi32>
    %c0_i32_0 = arith.constant 0 : i32
    %5 = vector.broadcast %c0_i32_0 : i32 to vector<16x128xi32>
    %6 = arith.cmpi ne, %4, %5 : vector<16x128xi32>
    %c0_i32_1 = arith.constant 0 : i32
    %7 = vector.broadcast %c0_i32_1 : i32 to vector<16x128xi32>
    %8 = arith.cmpi slt, %4, %7 : vector<16x128xi32>
    %c0_i32_2 = arith.constant 0 : i32
    %9 = arith.cmpi slt, %2, %c0_i32_2 : i32
    %10 = vector.broadcast %9 : i1 to vector<16x128xi1>
    %11 = vector.broadcast %10 : vector<16x128xi1> to vector<16x128xi1>
    %12 = arith.xori %8, %11 : vector<16x128xi1>
    %13 = arith.andi %12, %6 : vector<16x128xi1>
    %14 = vector.broadcast %2 : i32 to vector<16x128xi32>
    %15 = arith.addi %4, %14 : vector<16x128xi32>
    %16 = arith.select %13, %15, %4 : vector<16x128xi1>, vector<16x128xi32>
    %c0_i32_3 = arith.constant 0 : i32
    %17 = vector.broadcast %c0_i32_3 : i32 to vector<16x128xi32>
    %18 = arith.cmpi eq, %16, %17 : vector<16x128xi32>
    %c16_i32_4 = arith.constant 16 : i32
    %c0_i32_5 = arith.constant 0 : i32
    %19 = arith.cmpi eq, %c16_i32_4, %c0_i32_5 : i32
    %c1_i32_6 = arith.constant 1 : i32
    %20 = arith.select %19, %c1_i32_6, %c16_i32_4 : i32
    %21 = vector.broadcast %20 : i32 to vector<16x128xi32>
    %22 = arith.remsi %0, %21 : vector<16x128xi32>
    %c0_i32_7 = arith.constant 0 : i32
    %23 = vector.broadcast %c0_i32_7 : i32 to vector<16x128xi32>
    %24 = arith.cmpi ne, %22, %23 : vector<16x128xi32>
    %c0_i32_8 = arith.constant 0 : i32
    %25 = vector.broadcast %c0_i32_8 : i32 to vector<16x128xi32>
    %26 = arith.cmpi slt, %22, %25 : vector<16x128xi32>
    %c0_i32_9 = arith.constant 0 : i32
    %27 = arith.cmpi slt, %20, %c0_i32_9 : i32
    %28 = vector.broadcast %27 : i1 to vector<16x128xi1>
    %29 = vector.broadcast %28 : vector<16x128xi1> to vector<16x128xi1>
    %30 = arith.xori %26, %29 : vector<16x128xi1>
    %31 = arith.andi %30, %24 : vector<16x128xi1>
    %32 = vector.broadcast %20 : i32 to vector<16x128xi32>
    %33 = arith.addi %22, %32 : vector<16x128xi32>
    %34 = arith.select %31, %33, %22 : vector<16x128xi1>, vector<16x128xi32>
    %c15_i32 = arith.constant 15 : i32
    %35 = vector.broadcast %c15_i32 : i32 to vector<16x128xi32>
    %36 = arith.cmpi eq, %34, %35 : vector<16x128xi32>
    %c0 = arith.constant 0 : index
    %c0_10 = arith.constant 0 : index
    %37 = vector.load %arg1[%c0, %c0_10] : memref<16x128xbf16, #tpu.memory_space<vmem>>, vector<16x128xbf16>
    %38 = arith.extf %37 : vector<16x128xbf16> to vector<16x128xf32>
    %c0_11 = arith.constant 0 : index
    %c0_12 = arith.constant 0 : index
    %39 = vector.load %arg4[%c0_11, %c0_12] : memref<2x128xf32, #tpu.memory_space<vmem>>, vector<1x128xf32>
    %40 = arith.truncf %38 : vector<16x128xf32> to vector<16x128xbf16>
    %c1_i32_13 = arith.constant 1 : i32
    %41 = tpu.dynamic_rotate %38 by %c1_i32_13 dim 0 : vector<16x128xf32>, i32 -> vector<16x128xf32>
    %cst = arith.constant 0.000000e+00 : f32
    %42 = vector.broadcast %cst : f32 to vector<16x128xf32>
    %43 = arith.select %18, %42, %41 : vector<16x128xi1>, vector<16x128xf32>
    %44 = arith.truncf %43 : vector<16x128xf32> to vector<16x128xbf16>
    %c15_i32_14 = arith.constant 15 : i32
    %45 = tpu.dynamic_rotate %38 by %c15_i32_14 dim 0 : vector<16x128xf32>, i32 -> vector<16x128xf32>
    %cst_15 = arith.constant 0.000000e+00 : f32
    %46 = vector.broadcast %cst_15 : f32 to vector<16x128xf32>
    %47 = arith.select %36, %46, %45 : vector<16x128xi1>, vector<16x128xf32>
    %48 = arith.truncf %47 : vector<16x128xf32> to vector<16x128xbf16>
    %c0_16 = arith.constant 0 : index
    %c0_17 = arith.constant 0 : index
    %c0_18 = arith.constant 0 : index
    %49 = vector.load %arg2[%c0_16, %c0_17, %c0_18] : memref<3x128x128xbf16, #tpu.memory_space<vmem>>, vector<1x128x128xbf16>
    %50 = vector.shape_cast %49 : vector<1x128x128xbf16> to vector<128x128xbf16>
    %cst_19 = arith.constant dense<0.000000e+00> : vector<16x128xf32>
    %51 = tpu.matmul %44, %50, %cst_19 {dimension_numbers = #tpu.dot_dimension_numbers<[1], [0], [0], [1], [0, 0, 1, 1], [], []>} : vector<16x128xbf16>, vector<128x128xbf16>, vector<16x128xf32> -> vector<16x128xf32>
    %c1 = arith.constant 1 : index
    %c0_20 = arith.constant 0 : index
    %c0_21 = arith.constant 0 : index
    %52 = vector.load %arg2[%c1, %c0_20, %c0_21] : memref<3x128x128xbf16, #tpu.memory_space<vmem>>, vector<1x128x128xbf16>
    %53 = vector.shape_cast %52 : vector<1x128x128xbf16> to vector<128x128xbf16>
    %cst_22 = arith.constant dense<0.000000e+00> : vector<16x128xf32>
    %54 = tpu.matmul %40, %53, %cst_22 {dimension_numbers = #tpu.dot_dimension_numbers<[1], [0], [0], [1], [0, 0, 1, 1], [], []>} : vector<16x128xbf16>, vector<128x128xbf16>, vector<16x128xf32> -> vector<16x128xf32>
    %55 = arith.addf %51, %54 : vector<16x128xf32>
    %c2 = arith.constant 2 : index
    %c0_23 = arith.constant 0 : index
    %c0_24 = arith.constant 0 : index
    %56 = vector.load %arg2[%c2, %c0_23, %c0_24] : memref<3x128x128xbf16, #tpu.memory_space<vmem>>, vector<1x128x128xbf16>
    %57 = vector.shape_cast %56 : vector<1x128x128xbf16> to vector<128x128xbf16>
    %cst_25 = arith.constant dense<0.000000e+00> : vector<16x128xf32>
    %58 = tpu.matmul %48, %57, %cst_25 {dimension_numbers = #tpu.dot_dimension_numbers<[1], [0], [0], [1], [0, 0, 1, 1], [], []>} : vector<16x128xbf16>, vector<128x128xbf16>, vector<16x128xf32> -> vector<16x128xf32>
    %59 = arith.addf %55, %58 : vector<16x128xf32>
    %60 = vector.broadcast %39 : vector<1x128xf32> to vector<16x128xf32>
    %61 = arith.addf %59, %60 : vector<16x128xf32>
    %cst_26 = arith.constant 0.000000e+00 : f32
    %62 = vector.broadcast %cst_26 : f32 to vector<16x128xf32>
    %63 = arith.maximumf %61, %62 : vector<16x128xf32>
    %c1_27 = arith.constant 1 : index
    %c0_28 = arith.constant 0 : index
    %64 = vector.load %arg4[%c1_27, %c0_28] : memref<2x128xf32, #tpu.memory_space<vmem>>, vector<1x128xf32>
    %65 = arith.truncf %63 : vector<16x128xf32> to vector<16x128xbf16>
    %c1_i32_29 = arith.constant 1 : i32
    %66 = tpu.dynamic_rotate %63 by %c1_i32_29 dim 0 : vector<16x128xf32>, i32 -> vector<16x128xf32>
    %cst_30 = arith.constant 0.000000e+00 : f32
    %67 = vector.broadcast %cst_30 : f32 to vector<16x128xf32>
    %68 = arith.select %18, %67, %66 : vector<16x128xi1>, vector<16x128xf32>
    %69 = arith.truncf %68 : vector<16x128xf32> to vector<16x128xbf16>
    %c15_i32_31 = arith.constant 15 : i32
    %70 = tpu.dynamic_rotate %63 by %c15_i32_31 dim 0 : vector<16x128xf32>, i32 -> vector<16x128xf32>
    %cst_32 = arith.constant 0.000000e+00 : f32
    %71 = vector.broadcast %cst_32 : f32 to vector<16x128xf32>
    %72 = arith.select %36, %71, %70 : vector<16x128xi1>, vector<16x128xf32>
    %73 = arith.truncf %72 : vector<16x128xf32> to vector<16x128xbf16>
    %c0_33 = arith.constant 0 : index
    %c0_34 = arith.constant 0 : index
    %c0_35 = arith.constant 0 : index
    %74 = vector.load %arg3[%c0_33, %c0_34, %c0_35] : memref<3x128x128xbf16, #tpu.memory_space<vmem>>, vector<1x128x128xbf16>
    %75 = vector.shape_cast %74 : vector<1x128x128xbf16> to vector<128x128xbf16>
    %cst_36 = arith.constant dense<0.000000e+00> : vector<16x128xf32>
    %76 = tpu.matmul %69, %75, %cst_36 {dimension_numbers = #tpu.dot_dimension_numbers<[1], [0], [0], [1], [0, 0, 1, 1], [], []>} : vector<16x128xbf16>, vector<128x128xbf16>, vector<16x128xf32> -> vector<16x128xf32>
    %c1_37 = arith.constant 1 : index
    %c0_38 = arith.constant 0 : index
    %c0_39 = arith.constant 0 : index
    %77 = vector.load %arg3[%c1_37, %c0_38, %c0_39] : memref<3x128x128xbf16, #tpu.memory_space<vmem>>, vector<1x128x128xbf16>
    %78 = vector.shape_cast %77 : vector<1x128x128xbf16> to vector<128x128xbf16>
    %cst_40 = arith.constant dense<0.000000e+00> : vector<16x128xf32>
    %79 = tpu.matmul %65, %78, %cst_40 {dimension_numbers = #tpu.dot_dimension_numbers<[1], [0], [0], [1], [0, 0, 1, 1], [], []>} : vector<16x128xbf16>, vector<128x128xbf16>, vector<16x128xf32> -> vector<16x128xf32>
    %80 = arith.addf %76, %79 : vector<16x128xf32>
    %c2_41 = arith.constant 2 : index
    %c0_42 = arith.constant 0 : index
    %c0_43 = arith.constant 0 : index
    %81 = vector.load %arg3[%c2_41, %c0_42, %c0_43] : memref<3x128x128xbf16, #tpu.memory_space<vmem>>, vector<1x128x128xbf16>
    %82 = vector.shape_cast %81 : vector<1x128x128xbf16> to vector<128x128xbf16>
    %cst_44 = arith.constant dense<0.000000e+00> : vector<16x128xf32>
    %83 = tpu.matmul %73, %82, %cst_44 {dimension_numbers = #tpu.dot_dimension_numbers<[1], [0], [0], [1], [0, 0, 1, 1], [], []>} : vector<16x128xbf16>, vector<128x128xbf16>, vector<16x128xf32> -> vector<16x128xf32>
    %84 = arith.addf %80, %83 : vector<16x128xf32>
    %85 = vector.broadcast %64 : vector<1x128xf32> to vector<16x128xf32>
    %86 = arith.addf %84, %85 : vector<16x128xf32>
    %87 = arith.addf %86, %38 : vector<16x128xf32>
    %cst_45 = arith.constant 0.000000e+00 : f32
    %88 = vector.broadcast %cst_45 : f32 to vector<16x128xf32>
    %89 = arith.maximumf %87, %88 : vector<16x128xf32>
    %c0_46 = arith.constant 0 : index
    %c0_47 = arith.constant 0 : index
    %90 = vector.load %arg5[%c0_46, %c0_47] : memref<16x128xf32, #tpu.memory_space<vmem>>, vector<16x128xf32>
    tpu.vector_store %arg5[%c0_46, %c0_47], %89 {strides = array<i32>} : memref<16x128xf32, #tpu.memory_space<vmem>>, vector<16x128xf32>,
    return
  }
  func.func @transform_0(%arg0: i32) -> (i32, i32) {
    %c0_i32 = arith.constant 0 : i32
    %c0_i32_0 = arith.constant 0 : i32
    return %arg0, %c0_i32 : i32, i32
  }
  func.func @transform_1(%arg0: i32) -> (i32, i32, i32) {
    %c0_i32 = arith.constant 0 : i32
    %c0_i32_0 = arith.constant 0 : i32
    %c0_i32_1 = arith.constant 0 : i32
    %c0_i32_2 = arith.constant 0 : i32
    return %c0_i32, %c0_i32_0, %c0_i32_1 : i32, i32, i32
  }
  func.func @transform_2(%arg0: i32) -> (i32, i32, i32) {
    %c0_i32 = arith.constant 0 : i32
    %c0_i32_0 = arith.constant 0 : i32
    %c0_i32_1 = arith.constant 0 : i32
    %c0_i32_2 = arith.constant 0 : i32
    return %c0_i32, %c0_i32_0, %c0_i32_1 : i32, i32, i32
  }
  func.func @transform_3(%arg0: i32) -> (i32, i32) {
    %c0_i32 = arith.constant 0 : i32
    %c0_i32_0 = arith.constant 0 : i32
    %c0_i32_1 = arith.constant 0 : i32
    return %c0_i32, %c0_i32_0 : i32, i32
  }
  func.func @transform_4(%arg0: i32) -> (i32, i32) {
    %c0_i32 = arith.constant 0 : i32
    %c0_i32_0 = arith.constant 0 : i32
    return %arg0, %c0_i32 : i32, i32
  }
}

</mosaic_0001>

<llo_original>
// kernel: tpu_custom_call.1
$region0: #{tpu_custom_call.1}
  #allocation0 [shape = 'u32[]', space=smem, size = 0x4, offset = 0x4, fixed_abs, tag = 'smem constant byte address 0x4 - core index']
  #allocation1 [shape = 'u32[144,128]{1,0:T(1,128)}', space=vmem, size = 0x12000, scoped, tag = 'internal scratch']
  %s0 = inlined_call_operand.hbm [shape: bf16[32,128], index: 0, kind: input, shape index: {}]
  %s1 = inlined_call_operand.hbm [shape: bf16[3,128,128], index: 1, kind: input, shape index: {}]
  %s2 = inlined_call_operand.hbm [shape: bf16[3,128,128], index: 2, kind: input, shape index: {}]
  %s3 = inlined_call_operand.vmem [shape: f32[2,128], index: 3, kind: input, shape index: {}]
  %s4 = inlined_call_operand.hbm [shape: f32[32,128], index: 4, kind: output, shape index: {}]
  %s5 = sld [smem:[#allocation0]]
  $region61: #{tpu_custom_call.1} parent=0
    _
  %s7 = ssub.s32 1, %s5
  %s8 = scalar_select 0, %s7, %s5
  $region1: #{tpu_custom_call.1} parent=0
    #allocation2 [shape = 'u8[8192]{0}', space=vmem, size = 0x2000, scoped, tag = 'input window, operand 0']
    #allocation3 [shape = 's32[2]{0}', space=sflag, size = 0x8, scoped, tag = 'scoped memory for tpu_custom_call.1']
    #allocation4 [shape = 's32[2]{0}', space=sflag, size = 0x8, scoped, tag = 'scoped memory for tpu_custom_call.1']
    #allocation5 [shape = 'u8[98304]{0}', space=vmem, size = 0x18000, scoped, tag = 'input window, operand 1, single buffered']
    #allocation6 [shape = 's32[1]{0}', space=sflag, size = 0x4, scoped, tag = 'scoped memory for tpu_custom_call.1']
    #allocation7 [shape = 'u8[98304]{0}', space=vmem, size = 0x18000, scoped, tag = 'input window, operand 2, single buffered']
    #allocation8 [shape = 'u8[16384]{0}', space=vmem, size = 0x4000, scoped, tag = 'output window, operand 0']
    %9 = vsyncpa [#allocation3], 0
    %s10 = scalar_lea.sflag [#allocation3], 1
    %11 = vsyncpa %s10, 0
    %12 = vsyncpa [#allocation6], 0
    %13 = vsyncpa [#allocation4], 0
    %s14 = scalar_lea.sflag [#allocation4], 1
    %15 = vsyncpa %s14, 0
    loop: start=0, step=1, limit=4
    $region2: #{tpu_custom_call.1} parent=1 // loop_pre_header
      _
    $region3: #{tpu_custom_call.1} parent=1 // loop_header
      %s17 = sphi 0, %s21
      %p18 = scmp.ge.s32.totalorder %s17, 4
      %s27 = sphi 0, %s29
      %s30 = sphi 0, %s27
      %s31 = sphi 0, %s30
      %s47 = sphi 0, %s31
      %s51 = sphi 0, %s51
      %s53 = sphi 0, %s51
      %s54 = sphi 0, %s53
      %s68 = sphi 0, %s54
      %s72 = sphi 0, %s72
      %s74 = sphi 0, %s72
      %s75 = sphi 0, %s74
      %s89 = sphi 0, %s75
      %s93 = sphi 0, %s93
      %s95 = sphi 0, %s93
      %s96 = sphi 0, %s95
      %s110 = sphi 0, %s96
      %s116 = sphi 0, %s118
      %s119 = sphi 0, %s116
      %s120 = sphi 0, %s119
      %s136 = sphi 0, %s120
    $region4: #{tpu_custom_call.1} parent=1 // loop_header_branch
      %20 = sbr.rel (%p18) target = $region8
    $region5: #{tpu_custom_call.1} parent=1 // loop_body
      %s22 = ssub.s32 %s17, 1
      %s23 = ssub.s32 %s17, 2
      %s24 = sadd.s32 %s17, 1
      %s25 = ssub.s32 %s17, %s24
      %p26 = scmp.eq.s32.totalorder %s25, 0
      %s28 = sadd.s32 %s27, 1
      %s29 = scalar_select %p26, %s27, %s28
      %p32 = pneg %p26
      %p33 = scmp.eq.s32.totalorder %s17, 1
      %p34 = por %p32, %p33
      %p35 = scmp.ne.s32.totalorder %s27, %s30
      %p36 = scmp.eq.s32.totalorder %s17, 0
      %p37 = por %p35, %p36
      %p38 = scmp.ne.s32.totalorder %s27, %s30
      %p39 = scmp.eq.s32.totalorder %s22, 1
      %p40 = por %p38, %p39
      %p41 = scmp.ne.s32.totalorder %s30, %s31
      %p42 = scmp.eq.s32.totalorder %s22, 0
      %p43 = por %p41, %p42
      %p44 = scmp.ne.s32.totalorder %s30, %s31
      %p45 = scmp.eq.s32.totalorder %s23, 1
      %p46 = por %p44, %p45
      %p48 = scmp.ne.s32.totalorder %s31, %s47
      %p49 = scmp.eq.s32.totalorder %s23, 0
      %p50 = por %p48, %p49
      %s52 = sadd.s32 %s51, 1
      %p55 = scmp.eq.s32.totalorder %s17, 1
      %p56 = scmp.ne.s32.totalorder %s51, %s53
      %p57 = scmp.eq.s32.totalorder %s17, 0
      %p58 = por %p56, %p57
      %p59 = scmp.ne.s32.totalorder %s51, %s53
      %p60 = scmp.eq.s32.totalorder %s22, 1
      %p61 = por %p59, %p60
      %p62 = scmp.ne.s32.totalorder %s53, %s54
      %p63 = scmp.eq.s32.totalorder %s22, 0
      %p64 = por %p62, %p63
      %p65 = scmp.ne.s32.totalorder %s53, %s54
      %p66 = scmp.eq.s32.totalorder %s23, 1
      %p67 = por %p65, %p66
      %p69 = scmp.ne.s32.totalorder %s54, %s68
      %p70 = scmp.eq.s32.totalorder %s23, 0
      %p71 = por %p69, %p70
      %s73 = sadd.s32 %s72, 1
      %p76 = scmp.eq.s32.totalorder %s17, 1
      %p77 = scmp.ne.s32.totalorder %s72, %s74
      %p78 = scmp.eq.s32.totalorder %s17, 0
      %p79 = por %p77, %p78
      %p80 = scmp.ne.s32.totalorder %s72, %s74
      %p81 = scmp.eq.s32.totalorder %s22, 1
      %p82 = por %p80, %p81
      %p83 = scmp.ne.s32.totalorder %s74, %s75
      %p84 = scmp.eq.s32.totalorder %s22, 0
      %p85 = por %p83, %p84
      %p86 = scmp.ne.s32.totalorder %s74, %s75
      %p87 = scmp.eq.s32.totalorder %s23, 1
      %p88 = por %p86, %p87
      %p90 = scmp.ne.s32.totalorder %s75, %s89
      %p91 = scmp.eq.s32.totalorder %s23, 0
      %p92 = por %p90, %p91
      %s94 = sadd.s32 %s93, 1
      %p97 = scmp.eq.s32.totalorder %s17, 1
      %p98 = scmp.ne.s32.totalorder %s93, %s95
      %p99 = scmp.eq.s32.totalorder %s17, 0
      %p100 = por %p98, %p99
      %p101 = scmp.ne.s32.totalorder %s93, %s95
      %p102 = scmp.eq.s32.totalorder %s22, 1
      %p103 = por %p101, %p102
      %p104 = scmp.ne.s32.totalorder %s95, %s96
      %p105 = scmp.eq.s32.totalorder %s22, 0
      %p106 = por %p104, %p105
      %p107 = scmp.ne.s32.totalorder %s95, %s96
      %p108 = scmp.eq.s32.totalorder %s23, 1
      %p109 = por %p107, %p108
      %p111 = scmp.ne.s32.totalorder %s96, %s110
      %p112 = scmp.eq.s32.totalorder %s23, 0
      %p113 = por %p111, %p112
      %s114 = ssub.s32 %s17, %s24
      %p115 = scmp.eq.s32.totalorder %s114, 0
      %s117 = sadd.s32 %s116, 1
      %s118 = scalar_select %p115, %s116, %s117
      %p121 = pneg %p115
      %p122 = scmp.eq.s32.totalorder %s17, 1
      %p123 = por %p121, %p122
      %p124 = scmp.ne.s32.totalorder %s116, %s119
      %p125 = scmp.eq.s32.totalorder %s17, 0
      %p126 = por %p124, %p125
      %p127 = scmp.ne.s32.totalorder %s116, %s119
      %p128 = scmp.eq.s32.totalorder %s22, 1
      %p129 = por %p127, %p128
      %p130 = scmp.ne.s32.totalorder %s119, %s120
      %p131 = scmp.eq.s32.totalorder %s22, 0
      %p132 = por %p130, %p131
      %p133 = scmp.ne.s32.totalorder %s119, %s120
      %p134 = scmp.eq.s32.totalorder %s23, 1
      %p135 = por %p133, %p134
      %p137 = scmp.ne.s32.totalorder %s120, %s136
      %p138 = scmp.eq.s32.totalorder %s23, 0
      %p139 = por %p137, %p138
      %p140 = scmp.le.s32.totalorder 1, %s17
      %p141 = scmp.lt.s32.totalorder %s17, 3
      %p142 = pnand %p140, %p141
      %p143 = pneg %p142
      // Predicated region
      $region9: #{tpu_custom_call.1} parent=5 // pred_check
        _
      $region10: #{tpu_custom_call.1} parent=5 // pred_check_branch
        %145 = sbr.rel (%p142) target = $region12
      $region11: #{tpu_custom_call.1} parent=5 // pred_region
        %s146 = ssub.s32 %s17, 1
        // Predicated region
        $region13: #{tpu_custom_call.1} parent=11 // pred_check
          %p147 = pneg %p64
        $region14: #{tpu_custom_call.1} parent=11 // pred_check_branch
          %149 = sbr.rel (%p147) target = $region16
        $region15: #{tpu_custom_call.1} parent=11 // pred_region
          %s151 = ssub.s32 3072, 3072
          %152 = vsyncadd [#allocation6], %s151
          %s153 = sshll.u32 [#allocation5], 4
          %s154 = int_to_ptr.vmem [resolvable:$true] %s153
          %159 = dma.hbm_to_vmem [thread:$0]  %s1, 3072, %s154, [#allocation6], 64, 64, 4
        $region16: #{tpu_custom_call.1} parent=11 // pred_fallthru
          _
        // Predicated region
        $region17: #{tpu_custom_call.1} parent=11 // pred_check
          %p160 = pneg %p85
        $region18: #{tpu_custom_call.1} parent=11 // pred_check_branch
          %162 = sbr.rel (%p160) target = $region20
        $region19: #{tpu_custom_call.1} parent=11 // pred_region
          %s164 = ssub.s32 3072, 3072
          %165 = vsyncadd [#allocation6], %s164
          %s166 = sshll.u32 [#allocation7], 4
          %s167 = int_to_ptr.vmem [resolvable:$true] %s166
          %172 = dma.hbm_to_vmem [thread:$0]  %s2, 3072, %s167, [#allocation6], 64, 64, 4
        $region20: #{tpu_custom_call.1} parent=11 // pred_fallthru
          _
        // Predicated region
        $region21: #{tpu_custom_call.1} parent=11 // pred_check
          %p173 = pneg %p106
        $region22: #{tpu_custom_call.1} parent=11 // pred_check_branch
          %175 = sbr.rel (%p173) target = $region24
        $region23: #{tpu_custom_call.1} parent=11 // pred_region
          _
        $region24: #{tpu_custom_call.1} parent=11 // pred_fallthru
          _
      $region12: #{tpu_custom_call.1} parent=5 // pred_fallthru
        _
      %p176 = scmp.lt.s32.totalorder %s17, 2
      // Predicated region
      $region25: #{tpu_custom_call.1} parent=5 // pred_check
        %p177 = pneg %p176
      $region26: #{tpu_custom_call.1} parent=5 // pred_check_branch
        %179 = sbr.rel (%p177) target = $region28
      $region27: #{tpu_custom_call.1} parent=5 // pred_region
        // Predicated region
        $region29: #{tpu_custom_call.1} parent=27 // pred_check
          %p180 = pneg %p37
        $region30: #{tpu_custom_call.1} parent=27 // pred_check_branch
          %182 = sbr.rel (%p180) target = $region32
        $region31: #{tpu_custom_call.1} parent=27 // pred_region
          %s183 = sand.u32 %s27, 1
          %s184 = scalar_lea.sflag [#allocation3], %s183
          %s185 = sand.u32 %s27, 1
          %s186 = smul.addr %s185, 8
          %s187 = scalar_lea.vmem [#allocation2], %s186
          %s188 = smul.u32 2, %s17
          %s190 = ssub.s32 128, 128
          %191 = vsyncadd %s184, %s190
          %s192 = smul.addr %s188, 64
          %s193 = scalar_lea.hbm %s0, %s192
          %s194 = sshll.u32 %s187, 4
          %s195 = int_to_ptr.vmem [resolvable:$true] %s194
          %200 = dma.hbm_to_vmem [thread:$0]  %s193, 128, %s195, %s184, 64, 64, 4
        $region32: #{tpu_custom_call.1} parent=27 // pred_fallthru
          _
      $region28: #{tpu_custom_call.1} parent=5 // pred_fallthru
        _
      %p201 = scmp.le.s32.totalorder 1, %s17
      %p202 = scmp.lt.s32.totalorder %s17, 3
      %p203 = pnand %p201, %p202
      %p204 = pneg %p203
      // Predicated region
      $region33: #{tpu_custom_call.1} parent=5 // pred_check
        _
      $region34: #{tpu_custom_call.1} parent=5 // pred_check_branch
        %206 = sbr.rel (%p203) target = $region36
      $region35: #{tpu_custom_call.1} parent=5 // pred_region
        %s207 = ssub.s32 %s17, 1
        %s208 = sand.u32 %s30, 1
        %s209 = scalar_lea.sflag [#allocation3], %s208
        %s210 = sand.u32 %s30, 1
        %s211 = smul.addr %s210, 8
        %s212 = scalar_lea.vmem [#allocation2], %s211
        // Predicated region
        $region37: #{tpu_custom_call.1} parent=35 // pred_check
          %p213 = pneg %p43
        $region38: #{tpu_custom_call.1} parent=35 // pred_check_branch
          %215 = sbr.rel (%p213) target = $region40
        $region39: #{tpu_custom_call.1} parent=35 // pred_region
          %216 = dma.done %s209, 128
        $region40: #{tpu_custom_call.1} parent=35 // pred_fallthru
          _
        // Predicated region
        $region41: #{tpu_custom_call.1} parent=35 // pred_check
          %p217 = pneg %p64
        $region42: #{tpu_custom_call.1} parent=35 // pred_check_branch
          %219 = sbr.rel (%p217) target = $region44
        $region43: #{tpu_custom_call.1} parent=35 // pred_region
          %220 = dma.done [#allocation6], 3072
        $region44: #{tpu_custom_call.1} parent=35 // pred_fallthru
          _
        // Predicated region
        $region45: #{tpu_custom_call.1} parent=35 // pred_check
          %p221 = pneg %p85
        $region46: #{tpu_custom_call.1} parent=35 // pred_check_branch
          %223 = sbr.rel (%p221) target = $region48
        $region47: #{tpu_custom_call.1} parent=35 // pred_region
          %224 = dma.done [#allocation6], 3072
        $region48: #{tpu_custom_call.1} parent=35 // pred_fallthru
          _
        %s225 = sand.u32 %s30, 1
        %s226 = scalar_lea.sflag [#allocation3], %s225
        %s227 = sand.u32 %s30, 1
        %s228 = smul.addr %s227, 8
        %s229 = scalar_lea.vmem [#allocation2], %s228
        %p230 = pneg %p43
        %p231 = pneg %p40
        %p232 = pneg %p64
        %p233 = pneg %p61
        %p234 = pneg %p85
        %p235 = pneg %p82
        %p236 = pneg %p106
        %p237 = pneg %p103
        %p238 = pneg %p132
        %p239 = pneg %p129
        %s240 = sand.u32 %s119, 1
        %s241 = scalar_lea.sflag [#allocation4], %s240
        %s242 = sand.u32 %s119, 1
        %s243 = smul.addr %s242, 16
        %s244 = scalar_lea.vmem [#allocation8], %s243
        %s245 = smul.u32 2, %s22
        %s246 = smul.u32 2, %s22
        %v248 = vlaneseq
        %v249 = vshrl.u32 %v248, 7
        %v250 = vadd.s32 %v249, 8
        %vm251 = vcmp.lt.s32.totalorder %v249, 0
        %v252 = vsub.s32 0, %v249
        %v253 = vsel %vm251, %v252, %v249
        %v254 = vshrl.u32 %v253, 4
        %v255 = vand.u32 %v253, 15
        %v256 = vsub.s32 0, %v255
        %v257 = vsel %vm251, %v256, %v255
        %vm258 = vcmp.lt.s32.totalorder %v250, 0
        %v259 = vsub.s32 0, %v250
        %v260 = vsel %vm258, %v259, %v250
        %v261 = vshrl.u32 %v260, 4
        %v262 = vand.u32 %v260, 15
        %v263 = vsub.s32 0, %v262
        %v264 = vsel %vm258, %v263, %v262
        %vm265 = vcmp.ne.s32.totalorder %v257, 0
        %vm266 = vcmp.ne.s32.totalorder %v264, 0
        %vm267 = vcmp.lt.s32.totalorder %v257, 0
        %vm268 = vcmp.lt.s32.totalorder %v264, 0
        %vm269 = vmand %vm267, %vm265
        %vm270 = vmand %vm268, %vm266
        %v271 = vadd.s32 %v257, 16
        %v272 = vadd.s32 %v264, 16
        %v273 = vsel %vm269, %v271, %v257
        %v274 = vsel %vm270, %v272, %v264
        %vm275 = vcmp.eq.s32.totalorder %v273, 0
        %vm276 = vcmp.eq.s32.totalorder %v274, 0
        %vm277 = vcmp.eq.s32.totalorder %v273, 15
        %vm278 = vcmp.eq.s32.totalorder %v274, 15
        %v279 = vld [vmem:[%s212] sm:$0xf]
        %v280 = vld [vmem:[%s212 + $0x4] sm:$0xf]
        %v281 = vunpack.c.l.bf16 %v279
        %v282 = vunpack.c.l.bf16 %v280
        %v283 = vld [vmem:[%s3] sm:$0x1]
        %v284 = vrot.slane %v281, 7
        %v285 = vrot.slane %v282, 7
        %vm286 = vcmp.lt.s32.totalorder %v249, 1
        %v287 = vsel %vm286, %v284, %v285
        %v288 = vsel %vm286, %v285, %v284
        %v289 = vsel %vm275, 0.0, %v288
        %v290 = vsel %vm276, 0.0, %v287
        %v291 = vpack.c.bf16 %v290, %v289
        %v292 = vrot.slane %v281, 1
        %v293 = vrot.slane %v282, 1
        %vm294 = vcmp.lt.s32.totalorder %v249, 7
        %v295 = vsel %vm294, %v292, %v293
        %v296 = vsel %vm294, %v293, %v292
        %v297 = vsel %vm277, 0.0, %v295
        %v298 = vsel %vm278, 0.0, %v296
        %v299 = vpack.c.bf16 %v298, %v297
        %v300 = vld [vmem:[#allocation5] sm:$0xf]
        %v301 = vld [vmem:[#allocation5 + $0x4] sm:$0xf]
        %v302 = vld [vmem:[#allocation5 + $0x8] sm:$0xf]
        %v303 = vld [vmem:[#allocation5 + $0xc] sm:$0xf]
        %v304 = vld [vmem:[#allocation5 + $0x10] sm:$0xf]
        %v305 = vld [vmem:[#allocation5 + $0x14] sm:$0xf]
        %v306 = vld [vmem:[#allocation5 + $0x18] sm:$0xf]
        %v307 = vld [vmem:[#allocation5 + $0x1c] sm:$0xf]
        %v308 = vld [vmem:[#allocation5 + $0x20] sm:$0xf]
        %v309 = vld [vmem:[#allocation5 + $0x24] sm:$0xf]
        %v310 = vld [vmem:[#allocation5 + $0x28] sm:$0xf]
        %v311 = vld [vmem:[#allocation5 + $0x2c] sm:$0xf]
        %v312 = vld [vmem:[#allocation5 + $0x30] sm:$0xf]
        %v313 = vld [vmem:[#allocation5 + $0x34] sm:$0xf]
        %v314 = vld [vmem:[#allocation5 + $0x38] sm:$0xf]
        %v315 = vld [vmem:[#allocation5 + $0x3c] sm:$0xf]
        %s316 = scalar_lea.vmem [#allocation5], 64
        %v317 = vld [vmem:[%s316] sm:$0xf]
        %v318 = vld [vmem:[%s316 + $0x4] sm:$0xf]
        %v319 = vld [vmem:[%s316 + $0x8] sm:$0xf]
        %v320 = vld [vmem:[%s316 + $0xc] sm:$0xf]
        %v321 = vld [vmem:[%s316 + $0x10] sm:$0xf]
        %v322 = vld [vmem:[%s316 + $0x14] sm:$0xf]
        %v323 = vld [vmem:[%s316 + $0x18] sm:$0xf]
        %v324 = vld [vmem:[%s316 + $0x1c] sm:$0xf]
        %v325 = vld [vmem:[%s316 + $0x20] sm:$0xf]
        %v326 = vld [vmem:[%s316 + $0x24] sm:$0xf]
        %v327 = vld [vmem:[%s316 + $0x28] sm:$0xf]
        %v328 = vld [vmem:[%s316 + $0x2c] sm:$0xf]
        %v329 = vld [vmem:[%s316 + $0x30] sm:$0xf]
        %v330 = vld [vmem:[%s316 + $0x34] sm:$0xf]
        %v331 = vld [vmem:[%s316 + $0x38] sm:$0xf]
        %v332 = vld [vmem:[%s316 + $0x3c] sm:$0xf]
        %v335 = vunpack.c.l.b16 %v279
        %v336 = vunpack.c.l.b16 %v280
        %v337 = vpack.c.b16 %v336, %v335
        %v355 = vunpack.c.l.b16 %v317
        %v356 = vunpack.c.l.b16 %v318
        %v357 = vunpack.c.l.b16 %v319
        %v358 = vunpack.c.l.b16 %v320
        %v359 = vunpack.c.l.b16 %v321
        %v360 = vunpack.c.l.b16 %v322
        %v361 = vunpack.c.l.b16 %v323
        %v362 = vunpack.c.l.b16 %v324
        %v363 = vunpack.c.l.b16 %v325
        %v364 = vunpack.c.l.b16 %v326
        %v365 = vunpack.c.l.b16 %v327
        %v366 = vunpack.c.l.b16 %v328
        %v367 = vunpack.c.l.b16 %v329
        %v368 = vunpack.c.l.b16 %v330
        %v369 = vunpack.c.l.b16 %v331
        %v370 = vunpack.c.l.b16 %v332
        %v371 = vpack.c.b16 %v356, %v355
        %v372 = vpack.c.b16 %v358, %v357
        %v373 = vpack.c.b16 %v360, %v359
        %v374 = vpack.c.b16 %v362, %v361
        %v375 = vpack.c.b16 %v364, %v363
        %v376 = vpack.c.b16 %v366, %v365
        %v377 = vpack.c.b16 %v368, %v367
        %v378 = vpack.c.b16 %v370, %v369
        %387 = vmatprep.subr.bf16.mxu0 0
        %388 = vmatpush1.bf16.msra.mxu0 %v378
        %389 = vmatprep.subr.bf16.mxu0 0
        %390 = vmatpush1.bf16.msra.mxu0 %v377
        %391 = vmatprep.subr.bf16.mxu0 0
        %392 = vmatpush1.bf16.msra.mxu0 %v376
        %393 = vmatprep.subr.bf16.mxu0 0
        %394 = vmatpush1.bf16.msra.mxu0 %v375
        %395 = vmatprep.subr.bf16.mxu0 0
        %396 = vmatpush1.bf16.msra.mxu0 %v374
        %397 = vmatprep.subr.bf16.mxu0 0
        %398 = vmatpush1.bf16.msra.mxu0 %v373
        %399 = vmatprep.subr.bf16.mxu0 0
        %400 = vmatpush1.bf16.msra.mxu0 %v372
        %401 = vmatprep.subr.bf16.mxu0 0
        %402 = vmatpush1.bf16.msra.mxu0 %v371
        %403 = vmatprep.subr.bf16.mxu0 0
        %404 = vmatpush2.bf16.msra.mxu0 0
        %405 = vmatprep.subr.bf16.mxu0 0
        %406 = vmatpush2.bf16.msra.mxu0 0
        %407 = vmatprep.subr.bf16.mxu0 0
        %408 = vmatpush2.bf16.msra.mxu0 0
        %409 = vmatprep.subr.bf16.mxu0 0
        %410 = vmatpush2.bf16.msra.mxu0 0
        %411 = vmatprep.subr.bf16.mxu0 0
        %412 = vmatpush2.bf16.msra.mxu0 0
        %413 = vmatprep.subr.bf16.mxu0 0
        %414 = vmatpush2.bf16.msra.mxu0 0
        %415 = vmatprep.subr.bf16.mxu0 0
        %416 = vmatpush2.bf16.msra.mxu0 0
        %417 = vmatprep.subr.bf16.mxu0 0
        %418 = vmatpush2.bf16.msra.mxu0 0
        %419 = vmatprep.mubr.bf16.mxu0 0
        %420 = vmatmul.mubr.bf16.gmra.mxu0 %v337
        %v421 = vpop.f32.mrf.mxu0
        %v422 = vadd.f32 0.0, %v421
        %v423 = vpop.f32.mrf.mxu0
        %v424 = vpop.f32.mrf.mxu0
        %v425 = vadd.f32 0.0, %v424
        %v426 = vpop.f32.mrf.mxu0
        %427 = vdwg.mxu0
        %v444 = vunpack.c.l.b16 %v300
        %v445 = vunpack.c.l.b16 %v301
        %v446 = vunpack.c.l.b16 %v302
        %v447 = vunpack.c.l.b16 %v303
        %v448 = vunpack.c.l.b16 %v304
        %v449 = vunpack.c.l.b16 %v305
        %v450 = vunpack.c.l.b16 %v306
        %v451 = vunpack.c.l.b16 %v307
        %v452 = vunpack.c.l.b16 %v308
        %v453 = vunpack.c.l.b16 %v309
        %v454 = vunpack.c.l.b16 %v310
        %v455 = vunpack.c.l.b16 %v311
        %v456 = vunpack.c.l.b16 %v312
        %v457 = vunpack.c.l.b16 %v313
        %v458 = vunpack.c.l.b16 %v314
        %v459 = vunpack.c.l.b16 %v315
        %v460 = vpack.c.b16 %v445, %v444
        %v461 = vpack.c.b16 %v447, %v446
        %v462 = vpack.c.b16 %v449, %v448
        %v463 = vpack.c.b16 %v451, %v450
        %v464 = vpack.c.b16 %v453, %v452
        %v465 = vpack.c.b16 %v455, %v454
        %v466 = vpack.c.b16 %v457, %v456
        %v467 = vpack.c.b16 %v459, %v458
        %476 = vmatprep.subr.bf16.mxu0 0
        %477 = vmatpush1.bf16.msra.mxu0 %v467
        %478 = vmatprep.subr.bf16.mxu0 0
        %479 = vmatpush1.bf16.msra.mxu0 %v466
        %480 = vmatprep.subr.bf16.mxu0 0
        %481 = vmatpush1.bf16.msra.mxu0 %v465
        %482 = vmatprep.subr.bf16.mxu0 0
        %483 = vmatpush1.bf16.msra.mxu0 %v464
        %484 = vmatprep.subr.bf16.mxu0 0
        %485 = vmatpush1.bf16.msra.mxu0 %v463
        %486 = vmatprep.subr.bf16.mxu0 0
        %487 = vmatpush1.bf16.msra.mxu0 %v462
        %488 = vmatprep.subr.bf16.mxu0 0
        %489 = vmatpush1.bf16.msra.mxu0 %v461
        %490 = vmatprep.subr.bf16.mxu0 0
        %491 = vmatpush1.bf16.msra.mxu0 %v460
        %492 = vmatprep.subr.bf16.mxu0 0
        %493 = vmatpush2.bf16.msra.mxu0 0
        %494 = vmatprep.subr.bf16.mxu0 0
        %495 = vmatpush2.bf16.msra.mxu0 0
        %496 = vmatprep.subr.bf16.mxu0 0
        %497 = vmatpush2.bf16.msra.mxu0 0
        %498 = vmatprep.subr.bf16.mxu0 0
        %499 = vmatpush2.bf16.msra.mxu0 0
        %500 = vmatprep.subr.bf16.mxu0 0
        %501 = vmatpush2.bf16.msra.mxu0 0
        %502 = vmatprep.subr.bf16.mxu0 0
        %503 = vmatpush2.bf16.msra.mxu0 0
        %504 = vmatprep.subr.bf16.mxu0 0
        %505 = vmatpush2.bf16.msra.mxu0 0
        %506 = vmatprep.subr.bf16.mxu0 0
        %507 = vmatpush2.bf16.msra.mxu0 0
        %508 = vmatprep.mubr.bf16.mxu0 0
        %509 = vmatmul.mubr.bf16.gmra.mxu0 %v291
        %v510 = vpop.f32.mrf.mxu0
        %v511 = vadd.f32 %v422, %v510
        %v512 = vpop.f32.mrf.mxu0
        %v513 = vpop.f32.mrf.mxu0
        %v514 = vadd.f32 %v425, %v513
        %v515 = vpop.f32.mrf.mxu0
        %516 = vdwg.mxu0
        %s517 = scalar_lea.vmem [#allocation5], 128
        %v518 = vld [vmem:[%s517] sm:$0xf]
        %v519 = vld [vmem:[%s517 + $0x4] sm:$0xf]
        %v520 = vld [vmem:[%s517 + $0x8] sm:$0xf]
        %v521 = vld [vmem:[%s517 + $0xc] sm:$0xf]
        %v522 = vld [vmem:[%s517 + $0x10] sm:$0xf]
        %v523 = vld [vmem:[%s517 + $0x14] sm:$0xf]
        %v524 = vld [vmem:[%s517 + $0x18] sm:$0xf]
        %v525 = vld [vmem:[%s517 + $0x1c] sm:$0xf]
        %v526 = vld [vmem:[%s517 + $0x20] sm:$0xf]
        %v527 = vld [vmem:[%s517 + $0x24] sm:$0xf]
        %v528 = vld [vmem:[%s517 + $0x28] sm:$0xf]
        %v529 = vld [vmem:[%s517 + $0x2c] sm:$0xf]
        %v530 = vld [vmem:[%s517 + $0x30] sm:$0xf]
        %v531 = vld [vmem:[%s517 + $0x34] sm:$0xf]
        %v532 = vld [vmem:[%s517 + $0x38] sm:$0xf]
        %v533 = vld [vmem:[%s517 + $0x3c] sm:$0xf]
        %v550 = vunpack.c.l.b16 %v518
        %v551 = vunpack.c.l.b16 %v519
        %v552 = vunpack.c.l.b16 %v520
        %v553 = vunpack.c.l.b16 %v521
        %v554 = vunpack.c.l.b16 %v522
        %v555 = vunpack.c.l.b16 %v523
        %v556 = vunpack.c.l.b16 %v524
        %v557 = vunpack.c.l.b16 %v525
        %v558 = vunpack.c.l.b16 %v526
        %v559 = vunpack.c.l.b16 %v527
        %v560 = vunpack.c.l.b16 %v528
        %v561 = vunpack.c.l.b16 %v529
        %v562 = vunpack.c.l.b16 %v530
        %v563 = vunpack.c.l.b16 %v531
        %v564 = vunpack.c.l.b16 %v532
        %v565 = vunpack.c.l.b16 %v533
        %v566 = vpack.c.b16 %v551, %v550
        %v567 = vpack.c.b16 %v553, %v552
        %v568 = vpack.c.b16 %v555, %v554
        %v569 = vpack.c.b16 %v557, %v556
        %v570 = vpack.c.b16 %v559, %v558
        %v571 = vpack.c.b16 %v561, %v560
        %v572 = vpack.c.b16 %v563, %v562
        %v573 = vpack.c.b16 %v565, %v564
        %582 = vmatprep.subr.bf16.mxu0 0
        %583 = vmatpush1.bf16.msra.mxu0 %v573
        %584 = vmatprep.subr.bf16.mxu0 0
        %585 = vmatpush1.bf16.msra.mxu0 %v572
        %586 = vmatprep.subr.bf16.mxu0 0
        %587 = vmatpush1.bf16.msra.mxu0 %v571
        %588 = vmatprep.subr.bf16.mxu0 0
        %589 = vmatpush1.bf16.msra.mxu0 %v570
        %590 = vmatprep.subr.bf16.mxu0 0
        %591 = vmatpush1.bf16.msra.mxu0 %v569
        %592 = vmatprep.subr.bf16.mxu0 0
        %593 = vmatpush1.bf16.msra.mxu0 %v568
        %594 = vmatprep.subr.bf16.mxu0 0
        %595 = vmatpush1.bf16.msra.mxu0 %v567
        %596 = vmatprep.subr.bf16.mxu0 0
        %597 = vmatpush1.bf16.msra.mxu0 %v566
        %598 = vmatprep.subr.bf16.mxu0 0
        %599 = vmatpush2.bf16.msra.mxu0 0
        %600 = vmatprep.subr.bf16.mxu0 0
        %601 = vmatpush2.bf16.msra.mxu0 0
        %602 = vmatprep.subr.bf16.mxu0 0
        %603 = vmatpush2.bf16.msra.mxu0 0
        %604 = vmatprep.subr.bf16.mxu0 0
        %605 = vmatpush2.bf16.msra.mxu0 0
        %606 = vmatprep.subr.bf16.mxu0 0
        %607 = vmatpush2.bf16.msra.mxu0 0
        %608 = vmatprep.subr.bf16.mxu0 0
        %609 = vmatpush2.bf16.msra.mxu0 0
        %610 = vmatprep.subr.bf16.mxu0 0
        %611 = vmatpush2.bf16.msra.mxu0 0
        %612 = vmatprep.subr.bf16.mxu0 0
        %613 = vmatpush2.bf16.msra.mxu0 0
        %614 = vmatprep.mubr.bf16.mxu0 0
        %615 = vmatmul.mubr.bf16.gmra.mxu0 %v299
        %v616 = vpop.f32.mrf.mxu0
        %v617 = vadd.f32 0.0, %v616
        %v618 = vpop.f32.mrf.mxu0
        %v619 = vpop.f32.mrf.mxu0
        %v620 = vadd.f32 0.0, %v619
        %v621 = vpop.f32.mrf.mxu0
        %622 = vdwg.mxu0
        %v623 = vadd.f32 %v511, %v617
        %v624 = vadd.f32 %v514, %v620
        %v625 = vlaneseq
        %v626 = vshrl.u32 %v625, 7
        %v627 = vsub.s32 0, %v626
        %v628 = vrot.slane %v283, %v627
        %v629 = vadd.f32 %v623, %v628
        %v630 = vadd.f32 %v624, %v628
        %v631 = vmax.f32 %v629, 0.0
        %v632 = vmax.f32 %v630, 0.0
        %v633 = vld [vmem:[%s3 + $0x1] sm:$0x1]
        %v634 = vpack.c.bf16 %v632, %v631
        %v635 = vrot.slane %v631, 7
        %v636 = vrot.slane %v632, 7
        %v637 = vsel %vm286, %v635, %v636
        %v638 = vsel %vm286, %v636, %v635
        %v639 = vsel %vm275, 0.0, %v638
        %v640 = vsel %vm276, 0.0, %v637
        %v641 = vpack.c.bf16 %v640, %v639
        %v642 = vrot.slane %v631, 1
        %v643 = vrot.slane %v632, 1
        %v644 = vsel %vm294, %v642, %v643
        %v645 = vsel %vm294, %v643, %v642
        %v646 = vsel %vm277, 0.0, %v644
        %v647 = vsel %vm278, 0.0, %v645
        %v648 = vpack.c.bf16 %v647, %v646
        %v649 = vld [vmem:[#allocation7] sm:$0xf]
        %v650 = vld [vmem:[#allocation7 + $0x4] sm:$0xf]
        %v651 = vld [vmem:[#allocation7 + $0x8] sm:$0xf]
        %v652 = vld [vmem:[#allocation7 + $0xc] sm:$0xf]
        %v653 = vld [vmem:[#allocation7 + $0x10] sm:$0xf]
        %v654 = vld [vmem:[#allocation7 + $0x14] sm:$0xf]
        %v655 = vld [vmem:[#allocation7 + $0x18] sm:$0xf]
        %v656 = vld [vmem:[#allocation7 + $0x1c] sm:$0xf]
        %v657 = vld [vmem:[#allocation7 + $0x20] sm:$0xf]
        %v658 = vld [vmem:[#allocation7 + $0x24] sm:$0xf]
        %v659 = vld [vmem:[#allocation7 + $0x28] sm:$0xf]
        %v660 = vld [vmem:[#allocation7 + $0x2c] sm:$0xf]
        %v661 = vld [vmem:[#allocation7 + $0x30] sm:$0xf]
        %v662 = vld [vmem:[#allocation7 + $0x34] sm:$0xf]
        %v663 = vld [vmem:[#allocation7 + $0x38] sm:$0xf]
        %v664 = vld [vmem:[#allocation7 + $0x3c] sm:$0xf]
        %s665 = scalar_lea.vmem [#allocation7], 64
        %v666 = vld [vmem:[%s665] sm:$0xf]
        %v667 = vld [vmem:[%s665 + $0x4] sm:$0xf]
        %v668 = vld [vmem:[%s665 + $0x8] sm:$0xf]
        %v669 = vld [vmem:[%s665 + $0xc] sm:$0xf]
        %v670 = vld [vmem:[%s665 + $0x10] sm:$0xf]
        %v671 = vld [vmem:[%s665 + $0x14] sm:$0xf]
        %v672 = vld [vmem:[%s665 + $0x18] sm:$0xf]
        %v673 = vld [vmem:[%s665 + $0x1c] sm:$0xf]
        %v674 = vld [vmem:[%s665 + $0x20] sm:$0xf]
        %v675 = vld [vmem:[%s665 + $0x24] sm:$0xf]
        %v676 = vld [vmem:[%s665 + $0x28] sm:$0xf]
        %v677 = vld [vmem:[%s665 + $0x2c] sm:$0xf]
        %v678 = vld [vmem:[%s665 + $0x30] sm:$0xf]
        %v679 = vld [vmem:[%s665 + $0x34] sm:$0xf]
        %v680 = vld [vmem:[%s665 + $0x38] sm:$0xf]
        %v681 = vld [vmem:[%s665 + $0x3c] sm:$0xf]
        %v698 = vunpack.c.l.b16 %v666
        %v699 = vunpack.c.l.b16 %v667
        %v700 = vunpack.c.l.b16 %v668
        %v701 = vunpack.c.l.b16 %v669
        %v702 = vunpack.c.l.b16 %v670
        %v703 = vunpack.c.l.b16 %v671
        %v704 = vunpack.c.l.b16 %v672
        %v705 = vunpack.c.l.b16 %v673
        %v706 = vunpack.c.l.b16 %v674
        %v707 = vunpack.c.l.b16 %v675
        %v708 = vunpack.c.l.b16 %v676
        %v709 = vunpack.c.l.b16 %v677
        %v710 = vunpack.c.l.b16 %v678
        %v711 = vunpack.c.l.b16 %v679
        %v712 = vunpack.c.l.b16 %v680
        %v713 = vunpack.c.l.b16 %v681
        %v714 = vpack.c.b16 %v699, %v698
        %v715 = vpack.c.b16 %v701, %v700
        %v716 = vpack.c.b16 %v703, %v702
        %v717 = vpack.c.b16 %v705, %v704
        %v718 = vpack.c.b16 %v707, %v706
        %v719 = vpack.c.b16 %v709, %v708
        %v720 = vpack.c.b16 %v711, %v710
        %v721 = vpack.c.b16 %v713, %v712
        %730 = vmatprep.subr.bf16.mxu0 0
        %731 = vmatpush1.bf16.msra.mxu0 %v721
        %732 = vmatprep.subr.bf16.mxu0 0
        %733 = vmatpush1.bf16.msra.mxu0 %v720
        %734 = vmatprep.subr.bf16.mxu0 0
        %735 = vmatpush1.bf16.msra.mxu0 %v719
        %736 = vmatprep.subr.bf16.mxu0 0
        %737 = vmatpush1.bf16.msra.mxu0 %v718
        %738 = vmatprep.subr.bf16.mxu0 0
        %739 = vmatpush1.bf16.msra.mxu0 %v717
        %740 = vmatprep.subr.bf16.mxu0 0
        %741 = vmatpush1.bf16.msra.mxu0 %v716
        %742 = vmatprep.subr.bf16.mxu0 0
        %743 = vmatpush1.bf16.msra.mxu0 %v715
        %744 = vmatprep.subr.bf16.mxu0 0
        %745 = vmatpush1.bf16.msra.mxu0 %v714
        %746 = vmatprep.subr.bf16.mxu0 0
        %747 = vmatpush2.bf16.msra.mxu0 0
        %748 = vmatprep.subr.bf16.mxu0 0
        %749 = vmatpush2.bf16.msra.mxu0 0
        %750 = vmatprep.subr.bf16.mxu0 0
        %751 = vmatpush2.bf16.msra.mxu0 0
        %752 = vmatprep.subr.bf16.mxu0 0
        %753 = vmatpush2.bf16.msra.mxu0 0
        %754 = vmatprep.subr.bf16.mxu0 0
        %755 = vmatpush2.bf16.msra.mxu0 0
        %756 = vmatprep.subr.bf16.mxu0 0
        %757 = vmatpush2.bf16.msra.mxu0 0
        %758 = vmatprep.subr.bf16.mxu0 0
        %759 = vmatpush2.bf16.msra.mxu0 0
        %760 = vmatprep.subr.bf16.mxu0 0
        %761 = vmatpush2.bf16.msra.mxu0 0
        %762 = vmatprep.mubr.bf16.mxu0 0
        %763 = vmatmul.mubr.bf16.gmra.mxu0 %v634
        %v764 = vpop.f32.mrf.mxu0
        %v765 = vadd.f32 0.0, %v764
        %v766 = vpop.f32.mrf.mxu0
        %v767 = vpop.f32.mrf.mxu0
        %v768 = vadd.f32 0.0, %v767
        %v769 = vpop.f32.mrf.mxu0
        %770 = vdwg.mxu0
        %v787 = vunpack.c.l.b16 %v649
        %v788 = vunpack.c.l.b16 %v650
        %v789 = vunpack.c.l.b16 %v651
        %v790 = vunpack.c.l.b16 %v652
        %v791 = vunpack.c.l.b16 %v653
        %v792 = vunpack.c.l.b16 %v654
        %v793 = vunpack.c.l.b16 %v655
        %v794 = vunpack.c.l.b16 %v656
        %v795 = vunpack.c.l.b16 %v657
        %v796 = vunpack.c.l.b16 %v658
        %v797 = vunpack.c.l.b16 %v659
        %v798 = vunpack.c.l.b16 %v660
        %v799 = vunpack.c.l.b16 %v661
        %v800 = vunpack.c.l.b16 %v662
        %v801 = vunpack.c.l.b16 %v663
        %v802 = vunpack.c.l.b16 %v664
        %v803 = vpack.c.b16 %v788, %v787
        %v804 = vpack.c.b16 %v790, %v789
        %v805 = vpack.c.b16 %v792, %v791
        %v806 = vpack.c.b16 %v794, %v793
        %v807 = vpack.c.b16 %v796, %v795
        %v808 = vpack.c.b16 %v798, %v797
        %v809 = vpack.c.b16 %v800, %v799
        %v810 = vpack.c.b16 %v802, %v801
        %819 = vmatprep.subr.bf16.mxu0 0
        %820 = vmatpush1.bf16.msra.mxu0 %v810
        %821 = vmatprep.subr.bf16.mxu0 0
        %822 = vmatpush1.bf16.msra.mxu0 %v809
        %823 = vmatprep.subr.bf16.mxu0 0
        %824 = vmatpush1.bf16.msra.mxu0 %v808
        %825 = vmatprep.subr.bf16.mxu0 0
        %826 = vmatpush1.bf16.msra.mxu0 %v807
        %827 = vmatprep.subr.bf16.mxu0 0
        %828 = vmatpush1.bf16.msra.mxu0 %v806
        %829 = vmatprep.subr.bf16.mxu0 0
        %830 = vmatpush1.bf16.msra.mxu0 %v805
        %831 = vmatprep.subr.bf16.mxu0 0
        %832 = vmatpush1.bf16.msra.mxu0 %v804
        %833 = vmatprep.subr.bf16.mxu0 0
        %834 = vmatpush1.bf16.msra.mxu0 %v803
        %835 = vmatprep.subr.bf16.mxu0 0
        %836 = vmatpush2.bf16.msra.mxu0 0
        %837 = vmatprep.subr.bf16.mxu0 0
        %838 = vmatpush2.bf16.msra.mxu0 0
        %839 = vmatprep.subr.bf16.mxu0 0
        %840 = vmatpush2.bf16.msra.mxu0 0
        %841 = vmatprep.subr.bf16.mxu0 0
        %842 = vmatpush2.bf16.msra.mxu0 0
        %843 = vmatprep.subr.bf16.mxu0 0
        %844 = vmatpush2.bf16.msra.mxu0 0
        %845 = vmatprep.subr.bf16.mxu0 0
        %846 = vmatpush2.bf16.msra.mxu0 0
        %847 = vmatprep.subr.bf16.mxu0 0
        %848 = vmatpush2.bf16.msra.mxu0 0
        %849 = vmatprep.subr.bf16.mxu0 0
        %850 = vmatpush2.bf16.msra.mxu0 0
        %851 = vmatprep.mubr.bf16.mxu0 0
        %852 = vmatmul.mubr.bf16.gmra.mxu0 %v641
        %v853 = vpop.f32.mrf.mxu0
        %v854 = vadd.f32 %v765, %v853
        %v855 = vpop.f32.mrf.mxu0
        %v856 = vpop.f32.mrf.mxu0
        %v857 = vadd.f32 %v768, %v856
        %v858 = vpop.f32.mrf.mxu0
        %859 = vdwg.mxu0
        %s860 = scalar_lea.vmem [#allocation7], 128
        %v861 = vld [vmem:[%s860] sm:$0xf]
        %v862 = vld [vmem:[%s860 + $0x4] sm:$0xf]
        %v863 = vld [vmem:[%s860 + $0x8] sm:$0xf]
        %v864 = vld [vmem:[%s860 + $0xc] sm:$0xf]
        %v865 = vld [vmem:[%s860 + $0x10] sm:$0xf]
        %v866 = vld [vmem:[%s860 + $0x14] sm:$0xf]
        %v867 = vld [vmem:[%s860 + $0x18] sm:$0xf]
        %v868 = vld [vmem:[%s860 + $0x1c] sm:$0xf]
        %v869 = vld [vmem:[%s860 + $0x20] sm:$0xf]
        %v870 = vld [vmem:[%s860 + $0x24] sm:$0xf]
        %v871 = vld [vmem:[%s860 + $0x28] sm:$0xf]
        %v872 = vld [vmem:[%s860 + $0x2c] sm:$0xf]
        %v873 = vld [vmem:[%s860 + $0x30] sm:$0xf]
        %v874 = vld [vmem:[%s860 + $0x34] sm:$0xf]
        %v875 = vld [vmem:[%s860 + $0x38] sm:$0xf]
        %v876 = vld [vmem:[%s860 + $0x3c] sm:$0xf]
        %v893 = vunpack.c.l.b16 %v861
        %v894 = vunpack.c.l.b16 %v862
        %v895 = vunpack.c.l.b16 %v863
        %v896 = vunpack.c.l.b16 %v864
        %v897 = vunpack.c.l.b16 %v865
        %v898 = vunpack.c.l.b16 %v866
        %v899 = vunpack.c.l.b16 %v867
        %v900 = vunpack.c.l.b16 %v868
        %v901 = vunpack.c.l.b16 %v869
        %v902 = vunpack.c.l.b16 %v870
        %v903 = vunpack.c.l.b16 %v871
        %v904 = vunpack.c.l.b16 %v872
        %v905 = vunpack.c.l.b16 %v873
        %v906 = vunpack.c.l.b16 %v874
        %v907 = vunpack.c.l.b16 %v875
        %v908 = vunpack.c.l.b16 %v876
        %v909 = vpack.c.b16 %v894, %v893
        %v910 = vpack.c.b16 %v896, %v895
        %v911 = vpack.c.b16 %v898, %v897
        %v912 = vpack.c.b16 %v900, %v899
        %v913 = vpack.c.b16 %v902, %v901
        %v914 = vpack.c.b16 %v904, %v903
        %v915 = vpack.c.b16 %v906, %v905
        %v916 = vpack.c.b16 %v908, %v907
        %925 = vmatprep.subr.bf16.mxu0 0
        %926 = vmatpush1.bf16.msra.mxu0 %v916
        %927 = vmatprep.subr.bf16.mxu0 0
        %928 = vmatpush1.bf16.msra.mxu0 %v915
        %929 = vmatprep.subr.bf16.mxu0 0
        %930 = vmatpush1.bf16.msra.mxu0 %v914
        %931 = vmatprep.subr.bf16.mxu0 0
        %932 = vmatpush1.bf16.msra.mxu0 %v913
        %933 = vmatprep.subr.bf16.mxu0 0
        %934 = vmatpush1.bf16.msra.mxu0 %v912
        %935 = vmatprep.subr.bf16.mxu0 0
        %936 = vmatpush1.bf16.msra.mxu0 %v911
        %937 = vmatprep.subr.bf16.mxu0 0
        %938 = vmatpush1.bf16.msra.mxu0 %v910
        %939 = vmatprep.subr.bf16.mxu0 0
        %940 = vmatpush1.bf16.msra.mxu0 %v909
        %941 = vmatprep.subr.bf16.mxu0 0
        %942 = vmatpush2.bf16.msra.mxu0 0
        %943 = vmatprep.subr.bf16.mxu0 0
        %944 = vmatpush2.bf16.msra.mxu0 0
        %945 = vmatprep.subr.bf16.mxu0 0
        %946 = vmatpush2.bf16.msra.mxu0 0
        %947 = vmatprep.subr.bf16.mxu0 0
        %948 = vmatpush2.bf16.msra.mxu0 0
        %949 = vmatprep.subr.bf16.mxu0 0
        %950 = vmatpush2.bf16.msra.mxu0 0
        %951 = vmatprep.subr.bf16.mxu0 0
        %952 = vmatpush2.bf16.msra.mxu0 0
        %953 = vmatprep.subr.bf16.mxu0 0
        %954 = vmatpush2.bf16.msra.mxu0 0
        %955 = vmatprep.subr.bf16.mxu0 0
        %956 = vmatpush2.bf16.msra.mxu0 0
        %957 = vmatprep.mubr.bf16.mxu0 0
        %958 = vmatmul.mubr.bf16.gmra.mxu0 %v648
        %v959 = vpop.f32.mrf.mxu0
        %v960 = vadd.f32 0.0, %v959
        %v961 = vpop.f32.mrf.mxu0
        %v962 = vpop.f32.mrf.mxu0
        %v963 = vadd.f32 0.0, %v962
        %v964 = vpop.f32.mrf.mxu0
        %965 = vdwg.mxu0
        %v966 = vadd.f32 %v854, %v960
        %v967 = vadd.f32 %v857, %v963
        %v968 = vlaneseq
        %v969 = vshrl.u32 %v968, 7
        %v970 = vsub.s32 0, %v969
        %v971 = vrot.slane %v633, %v970
        %v972 = vadd.f32 %v966, %v971
        %v973 = vadd.f32 %v967, %v971
        %v974 = vadd.f32 %v972, %v281
        %v975 = vadd.f32 %v973, %v282
        %v976 = vmax.f32 %v974, 0.0
        %v977 = vmax.f32 %v975, 0.0
        %978 = vst [vmem:[%s244] sm:$0xff] %v976
        %979 = vst [vmem:[%s244 + $0x8] sm:$0xff] %v977
        %s980 = sand.u32 %s119, 1
        %s981 = scalar_lea.sflag [#allocation4], %s980
        %s982 = sand.u32 %s119, 1
        %s983 = smul.addr %s982, 16
        %s984 = scalar_lea.vmem [#allocation8], %s983
        // Predicated region
        $region49: #{tpu_custom_call.1} parent=35 // pred_check
          %p985 = pneg %p129
        $region50: #{tpu_custom_call.1} parent=35 // pred_check_branch
          %987 = sbr.rel (%p985) target = $region52
        $region51: #{tpu_custom_call.1} parent=35 // pred_region
          %s988 = smul.u32 2, %s22
          %s990 = ssub.s32 256, 256
          %991 = vsyncadd %s981, %s990
          %s992 = smul.addr %s988, 128
          %s993 = scalar_lea.hbm %s4, %s992
          %s994 = sshll.u32 %s984, 4
          %s995 = int_to_ptr.vmem [resolvable:$true] %s994
          %1000 = dma.vmem_to_hbm [thread:$0]  %s995, 256, %s993, %s981, 128, 128, 8
        $region52: #{tpu_custom_call.1} parent=35 // pred_fallthru
          _
      $region36: #{tpu_custom_call.1} parent=5 // pred_fallthru
        _
      %p1001 = scmp.le.s32.totalorder 2, %s17
      // Predicated region
      $region53: #{tpu_custom_call.1} parent=5 // pred_check
        %p1002 = pneg %p1001
      $region54: #{tpu_custom_call.1} parent=5 // pred_check_branch
        %1004 = sbr.rel (%p1002) target = $region56
      $region55: #{tpu_custom_call.1} parent=5 // pred_region
        %s1005 = ssub.s32 %s17, 2
        // Predicated region
        $region57: #{tpu_custom_call.1} parent=55 // pred_check
          %p1006 = pneg %p135
        $region58: #{tpu_custom_call.1} parent=55 // pred_check_branch
          %1008 = sbr.rel (%p1006) target = $region60
        $region59: #{tpu_custom_call.1} parent=55 // pred_region
          %s1009 = sand.u32 %s120, 1
          %s1010 = scalar_lea.sflag [#allocation4], %s1009
          %s1011 = sand.u32 %s120, 1
          %s1012 = smul.addr %s1011, 16
          %s1013 = scalar_lea.vmem [#allocation8], %s1012
          %1014 = dma.done %s1010, 256
        $region60: #{tpu_custom_call.1} parent=55 // pred_fallthru
          _
      $region56: #{tpu_custom_call.1} parent=5 // pred_fallthru
        _
    $region6: #{tpu_custom_call.1} parent=1 // loop_footer
      %s21 = sadd.s32 1, %s17
    $region7: #{tpu_custom_call.1} parent=1 // loop_footer_branch
      %16 = sbr.rel target = $region3
    $region8: #{tpu_custom_call.1} parent=1 // loop_exit
      _
    %1015 = vsyncpa [#allocation3], 1
    %s1016 = scalar_lea.sflag [#allocation3], 1
    %1017 = vsyncpa %s1016, 1
    %1018 = vsyncpa [#allocation6], 1
    %1019 = vsyncpa [#allocation4], 1
    %s1020 = scalar_lea.sflag [#allocation4], 1
    %1021 = vsyncpa %s1020, 1

</llo_original>
